<compile_context>
chip_gen: v6e
topology: v6e:2x2x1
jax: 0.10.0
libtpu: 0.0.40
codegen_flags: <defaults>
</compile_context>

<pallas_src>
import jax
import jax.numpy as jnp
from jax.experimental import pallas as pl
from jax.experimental.pallas import tpu as pltpu


def _round_up(v, m):
    return ((v + m - 1) // m) * m


def _vmem_budget_and_limit():
    """Returns (tiling budget, scoped-vmem limit) in bytes, per TPU generation."""
    try:
        cap = int(pltpu.get_tpu_info().vmem_capacity_bytes)
    except Exception:
        cap = 64 * 1024 * 1024              # conservative: v7x physical VMEM
    budget = (cap * 5) // 8                 # ~40 MiB on 64 MiB chips, ~80 MiB on 128 MiB
    limit = min((cap * 3) // 4, cap - 4 * 1024 * 1024)
    limit = max(limit, budget)
    return budget, limit


# ---------------------------------------------------------------------------
# Kernels
# ---------------------------------------------------------------------------
def _spec_embed_kernel(x_ref, w_ref, b_ref, o_ref):
    """Single-shot (no K split): o = x.float() @ W + b."""
    x = x_ref[...]
    if x.dtype != w_ref.dtype:
        x = x.astype(w_ref.dtype)           # x.float() done in VMEM (no extra HBM pass)
    acc = jnp.dot(x, w_ref[...], preferred_element_type=jnp.float32)   # MXU, f32 acc
    o_ref[...] = (acc + b_ref[...]).astype(o_ref.dtype)


def _spec_embed_kernel_ksplit(x_ref, w_ref, b_ref, o_ref, acc_ref):
    """K-split variant: accumulate partial products in an f32 VMEM scratch."""
    k = pl.program_id(1)

    @pl.when(k == 0)
    def _init():
        acc_ref[...] = jnp.zeros_like(acc_ref)

    x = x_ref[...]
    if x.dtype != w_ref.dtype:
        x = x.astype(w_ref.dtype)
    acc_ref[...] += jnp.dot(x, w_ref[...], preferred_element_type=jnp.float32)

    @pl.when(k == pl.num_programs(1) - 1)
    def _finalize():
        o_ref[...] = (acc_ref[...] + b_ref[...]).astype(o_ref.dtype)


# ---------------------------------------------------------------------------
# Wrapper
# ---------------------------------------------------------------------------
def spectrum_embedding_ir(x, weight, bias, *, tm=1024, out_dtype=jnp.float32):
    """Pallas implementation of SpectrumEmbedding_IR.forward.

    x:      (..., num_bins)  any dtype (non-float inputs are cast in-kernel, like x.float())
    weight: (embedding_dim, num_bins)  -- PyTorch nn.Linear layout
    bias:   (embedding_dim,)
    returns (..., embedding_dim) out_dtype (default float32, matching PyTorch)
    """
    num_bins = x.shape[-1]
    embedding_dim = weight.shape[0]
    lead_shape = x.shape[:-1]

    # x.float(): the actual cast of x happens inside the kernel, in VMEM.
    x_float_dtype = x.dtype if jnp.issubdtype(x.dtype, jnp.floating) else jnp.float32
    compute_dtype = jnp.promote_types(x_float_dtype, weight.dtype)

    x2 = jnp.reshape(x, (-1, num_bins))
    M = x2.shape[0]

    if M == 0:  # empty leading dims -> avoid a zero-size grid
        return jnp.zeros(lead_shape + (embedding_dim,), out_dtype)

    budget, vmem_limit = _vmem_budget_and_limit()
    wb = jnp.dtype(compute_dtype).itemsize

    # ---- lane-dense output packing --------------------------------------------
    # embedding_dim < 128 would force masked (vst.msk) stores.  Pack p consecutive
    # rows into one kernel row via a block-diagonal weight kron(I_p, W.T): the
    # (M/p, p*E) row-major output is bit-identical to (M, E), so the final reshape
    # is free and every store in the kernel is full lane width.
    p = 1
    if embedding_dim < 128 and 128 % embedding_dim == 0:
        cand = 128 // embedding_dim
        kron_bytes = 2 * (cand * num_bins) * (cand * embedding_dim) * wb  # dbl-buffered
        # M % cand != 0 falls back to p=1: slicing x to salvage the bulk would add a
        # full extra HBM pass over the input, which costs more than masked stores.
        if M % cand == 0 and kron_bytes <= max(4 * 1024 * 1024, budget // 8):
            p = cand

    K = p * num_bins
    N = p * embedding_dim
    M_rows = M // p

    # Weight / bias promotion hoisted out of the kernel (tiny, loop-invariant).
    w_t = jnp.transpose(weight).astype(compute_dtype)               # (num_bins, E)
    if p > 1:
        x2 = jnp.reshape(x2, (M_rows, K))                            # metadata-only reshape
        w_in = jnp.kron(jnp.eye(p, dtype=compute_dtype), w_t)        # (K, N) block-diag
        b_in = jnp.tile(jnp.reshape(bias, (1, embedding_dim)), (1, p))
    else:
        w_in = w_t
        b_in = jnp.reshape(bias, (1, embedding_dim))
    b_in = b_in.astype(jnp.float32)                                  # added to f32 accumulator

    xb = jnp.dtype(x2.dtype).itemsize
    ob = jnp.dtype(out_dtype).itemsize

    # ---- row tile size: closed form from the VMEM inequality -------------------
    fixed = 2 * K * N * wb + 2 * N * 4              # weight + bias (double-buffered)
    per_row = 2 * K * xb + 2 * N * ob               # x tile + out tile (double-buffered)
    tm_fit = (budget - fixed) // per_row if budget > fixed else 0
    tm_fit = max(0, (tm_fit // 8) * 8)

    tm_want = min(tm, _round_up(M_rows, 8))
    if M_rows >= 16:
        # Guarantee >=2 grid steps so the "parallel" axis can shard across the two
        # TensorCores on v7x (harmless single extra step elsewhere).
        tm_want = min(tm_want, _round_up(pl.cdiv(M_rows, 2), 8))
    tm_want = max(8, _round_up(tm_want, 8))

    use_ksplit = False
    tk = K
    if tm_fit >= tm_want:
        tm_eff = tm_want
    elif tm_fit >= min(tm_want, 512):
        tm_eff = tm_fit
    else:
        # VMEM-starved (very large num_bins): split K with an f32 accumulator so the
        # row tile stays large instead of collapsing.
        tm_eff = tm_want
        fixed_k = 2 * tm_eff * N * ob + tm_eff * N * 4 + 2 * N * 4
        per_k = 2 * tm_eff * xb + 2 * N * wb
        tk_max = (budget - fixed_k) // per_k if budget > fixed_k else 0
        tk_found = 0
        c = min(tk_max // 128, K // 128)
        while c >= 1:
            if K % (c * 128) == 0:
                tk_found = c * 128
                break
            c -= 1
        if tk_found >= 128:
            use_ksplit = True
            tk = tk_found
        else:
            tm_eff = max(8, tm_fit)                 # last resort: shrink rows (closed form)

    grid_m = pl.cdiv(M_rows, tm_eff)

    cost = pl.CostEstimate(
        flops=2 * M_rows * K * N,
        transcendentals=0,
        bytes_accessed=M_rows * K * xb + K * N * wb + N * 4 + M_rows * N * ob,
    )

    if not use_ksplit:
        grid = (grid_m,)
        in_specs = [
            pl.BlockSpec((tm_eff, K), lambda i: (i, 0)),
            pl.BlockSpec((K, N), lambda i: (0, 0)),
            pl.BlockSpec((1, N), lambda i: (0, 0)),
        ]
        out_specs = pl.BlockSpec((tm_eff, N), lambda i: (i, 0))
        scratch = []
        kernel = _spec_embed_kernel
        dims = ("parallel",)
    else:
        grid = (grid_m, K // tk)
        in_specs = [
            pl.BlockSpec((tm_eff, tk), lambda i, k: (i, k)),
            pl.BlockSpec((tk, N), lambda i, k: (k, 0)),
            pl.BlockSpec((1, N), lambda i, k: (0, 0)),
        ]
        out_specs = pl.BlockSpec((tm_eff, N), lambda i, k: (i, 0))
        scratch = [pltpu.VMEM((tm_eff, N), jnp.float32)]
        kernel = _spec_embed_kernel_ksplit
        dims = ("parallel", "arbitrary")

    out = pl.pallas_call(
        kernel,
        out_shape=jax.ShapeDtypeStruct((M_rows, N), out_dtype),
        grid_spec=pltpu.PrefetchScalarGridSpec(
            num_scalar_prefetch=0,
            grid=grid,
            in_specs=in_specs,
            out_specs=out_specs,
            scratch_shapes=scratch,
        ),
        compiler_params=pltpu.CompilerParams(
            dimension_semantics=dims,
            vmem_limit_bytes=int(vmem_limit),
        ),
        cost_estimate=cost,
    )(x2, w_in, b_in)

    # (M_rows, N) row-major is bit-identical to (M, embedding_dim); reshape is free.
    return jnp.reshape(out, lead_shape + (embedding_dim,))


def _reference(x, weight, bias):
    return jnp.einsum("...k,nk->...n", x.astype(jnp.float32), weight) + bias


if __name__ == "__main__":
    num_bins = 128
    embedding_dim = 64

    key = jax.random.PRNGKey(0)
    kx, kx2, kx3, kw, kb = jax.random.split(key, 5)

    # Deterministic params with the shapes of nn.Linear(num_bins, embedding_dim).
    bound = 1.0 / (num_bins ** 0.5)
    weight = jax.random.uniform(kw, (embedding_dim, num_bins),
                                minval=-bound, maxval=bound, dtype=jnp.float32)
    bias = jax.random.uniform(kb, (embedding_dim,),
                              minval=-bound, maxval=bound, dtype=jnp.float32)

    # Case 1: even row count -> lane-dense packed path (p=2, 128-wide stores).
    batch, seq = 2, 8
    x = jax.random.normal(kx, (batch, seq, num_bins), dtype=jnp.float32)
    y = jax.block_until_ready(spectrum_embedding_ir(x, weight, bias))
    y_ref = _reference(x, weight, bias)
    assert y.shape == (batch, seq, embedding_dim)
    assert y.dtype == jnp.float32
    assert jnp.allclose(y, y_ref, atol=1e-4, rtol=1e-4)

    # Case 2: odd row count -> p=1 fallback with a ragged (masked) last tile.
    x_odd = jax.random.normal(kx2, (3, 5, num_bins), dtype=jnp.float32)
    y_odd = jax.block_until_ready(spectrum_embedding_ir(x_odd, weight, bias))
    y_odd_ref = _reference(x_odd, weight, bias)
    assert y_odd.shape == (3, 5, embedding_dim)
    assert jnp.allclose(y_odd, y_odd_ref, atol=1e-4, rtol=1e-4)

    # Case 3: bf16 input -> cast to f32 happens inside the kernel (no HBM f32 copy).
    x_bf16 = jax.random.normal(kx, (batch, seq, num_bins), dtype=jnp.float32).astype(jnp.bfloat16)
    y_bf16 = jax.block_until_ready(spectrum_embedding_ir(x_bf16, weight, bias))
    y_bf16_ref = _reference(x_bf16, weight, bias)
    assert y_bf16.dtype == jnp.float32
    assert jnp.allclose(y_bf16, y_bf16_ref, atol=1e-3, rtol=1e-3)

    # Case 4: integer spectrum (counts) -> x.float() semantics, cast in-kernel.
    x_int = jax.random.randint(kx3, (batch, seq, num_bins), 0, 50, dtype=jnp.int32)
    y_int = jax.block_until_ready(spectrum_embedding_ir(x_int, weight, bias))
    y_int_ref = _reference(x_int, weight, bias)
    assert jnp.allclose(y_int, y_int_ref, atol=1e-3, rtol=1e-3)

    print("KERNEL_OK")
</pallas_src>

<mosaic_0001>
module attributes {stable_mosaic.version = 11 : i64} {
  func.func @_spec_embed_kernel(%arg0: i32, %arg1: memref<8x256xf32, #tpu.memory_space<vmem>>, %arg2: memref<256x128xf32, #tpu.memory_space<vmem>>, %arg3: memref<1x128xf32, #tpu.memory_space<vmem>>, %arg4: memref<8x128xf32, #tpu.memory_space<vmem>>) attributes {dimension_semantics = [#tpu.dimension_semantics<parallel>], iteration_bounds = array<i64: 1>, scalar_prefetch = 0 : i64, scratch_operands = 0 : i64, tpu.core_type = #tpu.core_type<tc>, window_params = [{transform_indices = @transform_0, window_bounds = array<i64: 8, 256>}, {pipeline_mode = #tpu.pipeline_mode<synchronous>, transform_indices = @transform_1, window_bounds = array<i64: 256, 128>}, {pipeline_mode = #tpu.pipeline_mode<synchronous>, transform_indices = @transform_2, window_bounds = array<i64: 1, 128>}, {transform_indices = @transform_3, window_bounds = array<i64: 8, 128>}]} {
    %c0 = arith.constant 0 : index
    %c0_0 = arith.constant 0 : index
    %0 = vector.load %arg1[%c0, %c0_0] : memref<8x256xf32, #tpu.memory_space<vmem>>, vector<8x256xf32>
    %c0_1 = arith.constant 0 : index
    %c0_2 = arith.constant 0 : index
    %1 = vector.load %arg2[%c0_1, %c0_2] : memref<256x128xf32, #tpu.memory_space<vmem>>, vector<256x128xf32>
    %cst = arith.constant dense<0.000000e+00> : vector<8x128xf32>
    %2 = tpu.matmul %0, %1, %cst {dimension_numbers = #tpu.dot_dimension_numbers<[1], [0], [0], [1], [0, 0, 1, 1], [], []>} : vector<8x256xf32>, vector<256x128xf32>, vector<8x128xf32> -> vector<8x128xf32>
    %c0_3 = arith.constant 0 : index
    %c0_4 = arith.constant 0 : index
    %3 = vector.load %arg3[%c0_3, %c0_4] : memref<1x128xf32, #tpu.memory_space<vmem>>, vector<1x128xf32>
    %4 = vector.broadcast %3 : vector<1x128xf32> to vector<8x128xf32>
    %5 = arith.addf %2, %4 : vector<8x128xf32>
    %c0_5 = arith.constant 0 : index
    %c0_6 = arith.constant 0 : index
    %6 = vector.load %arg4[%c0_5, %c0_6] : memref<8x128xf32, #tpu.memory_space<vmem>>, vector<8x128xf32>
    tpu.vector_store %arg4[%c0_5, %c0_6], %5 {strides = array<i32>} : memref<8x128xf32, #tpu.memory_space<vmem>>, vector<8x128xf32>,
    return
  }
  func.func @transform_0(%arg0: i32) -> (i32, i32) {
    %c0_i32 = arith.constant 0 : i32
    %c0_i32_0 = arith.constant 0 : i32
    return %arg0, %c0_i32 : i32, i32
  }
  func.func @transform_1(%arg0: i32) -> (i32, i32) {
    %c0_i32 = arith.constant 0 : i32
    %c0_i32_0 = arith.constant 0 : i32
    %c0_i32_1 = arith.constant 0 : i32
    return %c0_i32, %c0_i32_0 : i32, i32
  }
  func.func @transform_2(%arg0: i32) -> (i32, i32) {
    %c0_i32 = arith.constant 0 : i32
    %c0_i32_0 = arith.constant 0 : i32
    %c0_i32_1 = arith.constant 0 : i32
    return %c0_i32, %c0_i32_0 : i32, i32
  }
  func.func @transform_3(%arg0: i32) -> (i32, i32) {
    %c0_i32 = arith.constant 0 : i32
    %c0_i32_0 = arith.constant 0 : i32
    return %arg0, %c0_i32 : i32, i32
  }
}

</mosaic_0001>

<llo_original>
// kernel: tpu_custom_call.1
$region0: #{tpu_custom_call.1}
  #allocation0 [shape = 'u32[]', space=smem, size = 0x4, offset = 0x4, fixed_abs, tag = 'smem constant byte address 0x4 - core index']
  #allocation1 [shape = 'u32[144,128]{1,0:T(1,128)}', space=vmem, size = 0x12000, scoped, tag = 'internal scratch']
  %s0 = inlined_call_operand.hbm [shape: f32[8,256], index: 0, kind: input, shape index: {}]
  %s1 = inlined_call_operand.hbm [shape: f32[256,128], index: 1, kind: input, shape index: {}]
  %s2 = inlined_call_operand.vmem [shape: f32[1,128], index: 2, kind: input, shape index: {}]
  %s3 = inlined_call_operand.hbm [shape: f32[8,128], index: 3, kind: output, shape index: {}]
  %s4 = sld [smem:[#allocation0]]
  $region30: #{tpu_custom_call.1} parent=0
    _
  %s6 = ssub.s32 1, %s4
  %s7 = scalar_select 0, %s6, %s4
  $region1: #{tpu_custom_call.1} parent=0
    #allocation2 [shape = 'u8[8192]{0}', space=vmem, size = 0x2000, scoped, tag = 'input window, operand 0, single buffered']
    #allocation3 [shape = 's32[1]{0}', space=sflag, size = 0x4, scoped, tag = 'scoped memory for tpu_custom_call.1']
    #allocation4 [shape = 's32[1]{0}', space=sflag, size = 0x4, scoped, tag = 'scoped memory for tpu_custom_call.1']
    #allocation5 [shape = 'u8[131072]{0}', space=vmem, size = 0x20000, scoped, tag = 'input window, operand 1, single buffered']
    #allocation6 [shape = 's32[1]{0}', space=sflag, size = 0x4, scoped, tag = 'scoped memory for tpu_custom_call.1']
    #allocation7 [shape = 'u8[4096]{0}', space=vmem, size = 0x1000, scoped, tag = 'output window, operand 0, single buffered']
    %8 = vsyncpa [#allocation3], 0
    %9 = vsyncpa [#allocation6], 0
    %10 = vsyncpa [#allocation4], 0
    // Predicated region
    $region2: #{tpu_custom_call.1} parent=1 // pred_check
      _
    $region3: #{tpu_custom_call.1} parent=1 // pred_check_branch
      %12 = sbr.rel (0) target = $region5
    $region4: #{tpu_custom_call.1} parent=1 // pred_region
      %s14 = ssub.s32 256, 256
      %15 = vsyncadd [#allocation3], %s14
      %s17 = sshll.u32 [#allocation2], 4
      %s18 = int_to_ptr.vmem [resolvable:$true] %s17
      %20 = dma.hbm_to_vmem [thread:$0]  %s0, 256, %s18, [#allocation3]
    $region5: #{tpu_custom_call.1} parent=1 // pred_fallthru
      _
    // Predicated region
    $region6: #{tpu_custom_call.1} parent=1 // pred_check
      _
    $region7: #{tpu_custom_call.1} parent=1 // pred_check_branch
      %22 = sbr.rel (0) target = $region9
    $region8: #{tpu_custom_call.1} parent=1 // pred_region
      %s24 = ssub.s32 4096, 4096
      %25 = vsyncadd [#allocation6], %s24
      %s26 = sshll.u32 [#allocation5], 4
      %s27 = int_to_ptr.vmem [resolvable:$true] %s26
      %32 = dma.hbm_to_vmem [thread:$0]  %s1, 4096, %s27, [#allocation6], 128, 128, 8
    $region9: #{tpu_custom_call.1} parent=1 // pred_fallthru
      _
    // Predicated region
    $region10: #{tpu_custom_call.1} parent=1 // pred_check
      _
    $region11: #{tpu_custom_call.1} parent=1 // pred_check_branch
      %34 = sbr.rel (0) target = $region13
    $region12: #{tpu_custom_call.1} parent=1 // pred_region
      _
    $region13: #{tpu_custom_call.1} parent=1 // pred_fallthru
      _
    // Predicated region
    $region14: #{tpu_custom_call.1} parent=1 // pred_check
      _
    $region15: #{tpu_custom_call.1} parent=1 // pred_check_branch
      %36 = sbr.rel (0) target = $region17
    $region16: #{tpu_custom_call.1} parent=1 // pred_region
      %37 = dma.done [#allocation3], 256
    $region17: #{tpu_custom_call.1} parent=1 // pred_fallthru
      _
    // Predicated region
    $region18: #{tpu_custom_call.1} parent=1 // pred_check
      _
    $region19: #{tpu_custom_call.1} parent=1 // pred_check_branch
      %39 = sbr.rel (0) target = $region21
    $region20: #{tpu_custom_call.1} parent=1 // pred_region
      %40 = dma.done [#allocation6], 4096
    $region21: #{tpu_custom_call.1} parent=1 // pred_fallthru
      _
    %v41 = vld [vmem:[#allocation2] sm:$0xff]
    %v42 = vld [vmem:[#allocation2 + $0x8] sm:$0xff]
    %v43 = vld [vmem:[#allocation5] sm:$0xff]
    %v44 = vld [vmem:[#allocation5 + $0x8] sm:$0xff]
    %v45 = vld [vmem:[#allocation5 + $0x10] sm:$0xff]
    %v46 = vld [vmem:[#allocation5 + $0x18] sm:$0xff]
    %v47 = vld [vmem:[#allocation5 + $0x20] sm:$0xff]
    %v48 = vld [vmem:[#allocation5 + $0x28] sm:$0xff]
    %v49 = vld [vmem:[#allocation5 + $0x30] sm:$0xff]
    %v50 = vld [vmem:[#allocation5 + $0x38] sm:$0xff]
    %v51 = vld [vmem:[#allocation5 + $0x40] sm:$0xff]
    %v52 = vld [vmem:[#allocation5 + $0x48] sm:$0xff]
    %v53 = vld [vmem:[#allocation5 + $0x50] sm:$0xff]
    %v54 = vld [vmem:[#allocation5 + $0x58] sm:$0xff]
    %v55 = vld [vmem:[#allocation5 + $0x60] sm:$0xff]
    %v56 = vld [vmem:[#allocation5 + $0x68] sm:$0xff]
    %v57 = vld [vmem:[#allocation5 + $0x70] sm:$0xff]
    %v58 = vld [vmem:[#allocation5 + $0x78] sm:$0xff]
    %v59 = vld [vmem:[#allocation5 + $0x80] sm:$0xff]
    %v60 = vld [vmem:[#allocation5 + $0x88] sm:$0xff]
    %v61 = vld [vmem:[#allocation5 + $0x90] sm:$0xff]
    %v62 = vld [vmem:[#allocation5 + $0x98] sm:$0xff]
    %v63 = vld [vmem:[#allocation5 + $0xa0] sm:$0xff]
    %v64 = vld [vmem:[#allocation5 + $0xa8] sm:$0xff]
    %v65 = vld [vmem:[#allocation5 + $0xb0] sm:$0xff]
    %v66 = vld [vmem:[#allocation5 + $0xb8] sm:$0xff]
    %v67 = vld [vmem:[#allocation5 + $0xc0] sm:$0xff]
    %v68 = vld [vmem:[#allocation5 + $0xc8] sm:$0xff]
    %v69 = vld [vmem:[#allocation5 + $0xd0] sm:$0xff]
    %v70 = vld [vmem:[#allocation5 + $0xd8] sm:$0xff]
    %v71 = vld [vmem:[#allocation5 + $0xe0] sm:$0xff]
    %v72 = vld [vmem:[#allocation5 + $0xe8] sm:$0xff]
    %v73 = vld [vmem:[#allocation5 + $0xf0] sm:$0xff]
    %v74 = vld [vmem:[#allocation5 + $0xf8] sm:$0xff]
    %v75 = vld [vmem:[%s2] sm:$0x1]
    %v77 = vlaneseq
    %v78 = vshrl.u32 %v77, 7
    %v79 = vsub.s32 0, %v78
    %v80 = vrot.slane %v75, %v79
    %82 = vmatprep.subr.mxu0 0.0
    %83 = vmatpush1.msra.mxu0 %v58
    %84 = vmatprep.subr.mxu0 0.0
    %85 = vmatpush1.msra.mxu0 %v57
    %86 = vmatprep.subr.mxu0 0.0
    %87 = vmatpush1.msra.mxu0 %v56
    %88 = vmatprep.subr.mxu0 0.0
    %89 = vmatpush1.msra.mxu0 %v55
    %90 = vmatprep.subr.mxu0 0.0
    %91 = vmatpush1.msra.mxu0 %v54
    %92 = vmatprep.subr.mxu0 0.0
    %93 = vmatpush1.msra.mxu0 %v53
    %94 = vmatprep.subr.mxu0 0.0
    %95 = vmatpush1.msra.mxu0 %v52
    %96 = vmatprep.subr.mxu0 0.0
    %97 = vmatpush1.msra.mxu0 %v51
    %98 = vmatprep.subr.mxu0 0.0
    %99 = vmatpush1.msra.mxu0 %v50
    %100 = vmatprep.subr.mxu0 0.0
    %101 = vmatpush1.msra.mxu0 %v49
    %102 = vmatprep.subr.mxu0 0.0
    %103 = vmatpush1.msra.mxu0 %v48
    %104 = vmatprep.subr.mxu0 0.0
    %105 = vmatpush1.msra.mxu0 %v47
    %106 = vmatprep.subr.mxu0 0.0
    %107 = vmatpush1.msra.mxu0 %v46
    %108 = vmatprep.subr.mxu0 0.0
    %109 = vmatpush1.msra.mxu0 %v45
    %110 = vmatprep.subr.mxu0 0.0
    %111 = vmatpush1.msra.mxu0 %v44
    %112 = vmatprep.subr.mxu0 0.0
    %113 = vmatpush1.msra.mxu0 %v43
    %114 = vmatprep.subr.mxu0 0.0
    %115 = vmatpush2.msra.mxu0 %v74
    %116 = vmatprep.subr.mxu0 0.0
    %117 = vmatpush2.msra.mxu0 %v73
    %118 = vmatprep.subr.mxu0 0.0
    %119 = vmatpush2.msra.mxu0 %v72
    %120 = vmatprep.subr.mxu0 0.0
    %121 = vmatpush2.msra.mxu0 %v71
    %122 = vmatprep.subr.mxu0 0.0
    %123 = vmatpush2.msra.mxu0 %v70
    %124 = vmatprep.subr.mxu0 0.0
    %125 = vmatpush2.msra.mxu0 %v69
    %126 = vmatprep.subr.mxu0 0.0
    %127 = vmatpush2.msra.mxu0 %v68
    %128 = vmatprep.subr.mxu0 0.0
    %129 = vmatpush2.msra.mxu0 %v67
    %130 = vmatprep.subr.mxu0 0.0
    %131 = vmatpush2.msra.mxu0 %v66
    %132 = vmatprep.subr.mxu0 0.0
    %133 = vmatpush2.msra.mxu0 %v65
    %134 = vmatprep.subr.mxu0 0.0
    %135 = vmatpush2.msra.mxu0 %v64
    %136 = vmatprep.subr.mxu0 0.0
    %137 = vmatpush2.msra.mxu0 %v63
    %138 = vmatprep.subr.mxu0 0.0
    %139 = vmatpush2.msra.mxu0 %v62
    %140 = vmatprep.subr.mxu0 0.0
    %141 = vmatpush2.msra.mxu0 %v61
    %142 = vmatprep.subr.mxu0 0.0
    %143 = vmatpush2.msra.mxu0 %v60
    %144 = vmatprep.subr.mxu0 0.0
    %145 = vmatpush2.msra.mxu0 %v59
    %146 = vmatprep.mubr.f32.mxu0 %v42
    %147 = vmatmul.mubr.f32.gmra.mxu0 %v41
    %v148 = vpop.f32.mrf.mxu0
    %v149 = vadd.f32 %v80, %v148
    %v150 = vpop.f32.mrf.mxu0
    %151 = vdwg.mxu0
    %152 = vst [vmem:[#allocation7] sm:$0xff] %v149
    // Predicated region
    $region22: #{tpu_custom_call.1} parent=1 // pred_check
      _
    $region23: #{tpu_custom_call.1} parent=1 // pred_check_branch
      %154 = sbr.rel (0) target = $region25
    $region24: #{tpu_custom_call.1} parent=1 // pred_region
      %s156 = ssub.s32 128, 128
      %157 = vsyncadd [#allocation4], %s156
      %s159 = sshll.u32 [#allocation7], 4
      %s160 = int_to_ptr.vmem [resolvable:$true] %s159
      %162 = dma.vmem_to_hbm [thread:$0]  %s160, 128, %s3, [#allocation4]
    $region25: #{tpu_custom_call.1} parent=1 // pred_fallthru
      _
    // Predicated region
    $region26: #{tpu_custom_call.1} parent=1 // pred_check
      _
    $region27: #{tpu_custom_call.1} parent=1 // pred_check_branch
      %164 = sbr.rel (0) target = $region29
    $region28: #{tpu_custom_call.1} parent=1 // pred_region
      %165 = dma.done [#allocation4], 128
    $region29: #{tpu_custom_call.1} parent=1 // pred_fallthru
      _
    %166 = vsyncpa [#allocation3], 1
    %167 = vsyncpa [#allocation6], 1
    %168 = vsyncpa [#allocation4], 1

</llo_original>
